<compile_context>
chip_gen: v7x
topology: tpu7x:2x2x1
jax: 0.10.0
libtpu: 0.0.40
codegen_flags: <defaults>
</compile_context>

<pallas_src>
import functools

import jax
import jax.numpy as jnp
from jax.experimental import pallas as pl
from jax.experimental.pallas import tpu as pltpu

LANE = 128
SUBLANE = 8
MIN_TILE_ROWS = 256            # floor: tiny tiles land at ~30% of HBM roofline
DEFAULT_TILE_ROWS = 2048       # 5 MiB/step f32 -> ~10 MiB double-buffered
_PALLAS_MIN_ELEMENTS = 1 << 18  # below this, 4 fused scalar muls in XLA win


def chain_linear_kernel(cw_ref, x_ref, o_ref):
    # cw_ref: SMEM (4,) f32          -- cumulative weights c_i = w_0*...*w_i
    # x_ref : VMEM (tile_rows, 128)  -- lane-dense input tile (input dtype)
    # o_ref : VMEM (tile_rows, 512)  -- [layer0 | layer1 | layer2 | layer3]
    x = x_ref[...].astype(jnp.float32)
    # 4 independent vector*scalar multiplies (no serial chain); each store is a
    # 128-lane-aligned static slice of the single contiguous output tile.
    o_ref[:, 0 * LANE:1 * LANE] = (x * cw_ref[0]).astype(o_ref.dtype)
    o_ref[:, 1 * LANE:2 * LANE] = (x * cw_ref[1]).astype(o_ref.dtype)
    o_ref[:, 2 * LANE:3 * LANE] = (x * cw_ref[2]).astype(o_ref.dtype)
    o_ref[:, 3 * LANE:4 * LANE] = (x * cw_ref[3]).astype(o_ref.dtype)


def _jnp_forward(x, weights):
    cw = jnp.cumprod(weights.astype(jnp.float32))
    return [(x.astype(jnp.float32) * cw[i]).astype(x.dtype) for i in range(4)]


@functools.partial(
    jax.jit, static_argnames=("force_pallas", "tile_rows", "return_packed")
)
def net_forward(x, weights, *, force_pallas=False, tile_rows=None,
                return_packed=False):
    """x: (B, 1), weights: (4,) (the four (1,1) Linear weights squeezed).

    Returns the list of 4 intermediate activations, each shaped/dtyped like x.
    With return_packed=True, returns the lane-dense (rows, 4*128) slab where
    activation i occupies columns [i*128:(i+1)*128], row-major over the first
    n = x.size flat elements — consumers can use it directly and skip the
    unpack copies (the remaining avoidable HBM traffic)."""
    n = x.size
    in_dtype = x.dtype

    if not force_pallas and n < _PALLAS_MIN_ELEMENTS and not return_packed:
        # Small sizes: kernel launch + unpack dwarf the ~4n flops of work.
        return _jnp_forward(x, weights)

    # Cumulative products of the 4 layer weights (scalar-prefetched to SMEM).
    cw = jnp.cumprod(weights.astype(jnp.float32))

    # ---- lane-dense layout: pad flat x only to the next (8,128) tile --------
    rows = pl.cdiv(n, SUBLANE * LANE) * SUBLANE     # multiple of 8
    pad = rows * LANE - n                           # < 1024 elements
    xf = x.reshape(-1)
    if pad:
        xf = jnp.pad(xf, (0, pad))
    x2d = xf.reshape(rows, LANE)                    # keep input dtype

    if tile_rows is None:
        tile_rows = DEFAULT_TILE_ROWS
    tile_rows = max(MIN_TILE_ROWS, (tile_rows // SUBLANE) * SUBLANE)
    tile_rows = min(tile_rows, rows)                # rows is a multiple of 8
    grid = pl.cdiv(rows, tile_rows)                 # ragged trailing tile OK

    out = pl.pallas_call(
        chain_linear_kernel,
        out_shape=jax.ShapeDtypeStruct((rows, 4 * LANE), in_dtype),
        grid_spec=pltpu.PrefetchScalarGridSpec(
            num_scalar_prefetch=1,                  # cw -> SMEM, 1st kernel arg
            grid=(grid,),
            in_specs=[
                pl.BlockSpec((tile_rows, LANE), lambda i, cw_ref: (i, 0)),
            ],
            out_specs=pl.BlockSpec(
                (tile_rows, 4 * LANE), lambda i, cw_ref: (i, 0)
            ),
        ),
        compiler_params=pltpu.CompilerParams(
            dimension_semantics=("parallel",),      # megacore sharding on v7x
        ),
    )(cw, x2d)

    if return_packed:
        return out

    # Unpack to the module's contract: list of 4 arrays shaped like x.
    # TODO(synk): prefer return_packed=True in real consumers; this slice /
    # reshape is the remaining avoidable HBM traffic outside the kernel.
    return [
        out[:, i * LANE:(i + 1) * LANE].reshape(-1)[:n].reshape(x.shape)
        for i in range(4)
    ]


def _reference(x, weights):
    ref = []
    cur = x
    for i in range(4):
        cur = cur * weights[i]
        ref.append(cur)
    return ref


if __name__ == "__main__":
    key = jax.random.PRNGKey(0)
    kx, kw, kx2 = jax.random.split(key, 3)

    # Small batch consistent with the module: x is (B, 1).
    B = 8
    x = jax.random.normal(kx, (B, 1), dtype=jnp.float32)
    weights = jax.random.uniform(kw, (4,), dtype=jnp.float32, minval=-1.0, maxval=1.0)

    # Pallas path (forced, since B is tiny), single grid step.
    result = net_forward(x, weights, force_pallas=True)
    result = [jax.block_until_ready(r) for r in result]
    ref = _reference(x, weights)
    for r, rr in zip(result, ref):
        assert r.shape == (B, 1)
        assert jnp.allclose(r, rr, atol=1e-6, rtol=1e-6), "mismatch vs reference"

    # Larger batch with an explicit (floor-sized) tile: multi-step pipelined
    # grid (264 rows, tile_rows=256 -> grid=2) plus a ragged trailing tile.
    B2 = 33_000
    x2 = jax.random.normal(kx2, (B2, 1), dtype=jnp.float32)
    result2 = net_forward(x2, weights, force_pallas=True, tile_rows=256)
    result2 = [jax.block_until_ready(r) for r in result2]
    ref2 = _reference(x2, weights)
    for r, rr in zip(result2, ref2):
        assert r.shape == (B2, 1)
        assert jnp.allclose(r, rr, atol=1e-6, rtol=1e-6), "mismatch vs reference (B2)"

    # bf16 input: output comes back in bf16 straight from the kernel.
    x_bf16 = x.astype(jnp.bfloat16)
    result_bf = net_forward(x_bf16, weights, force_pallas=True)
    result_bf = [jax.block_until_ready(r) for r in result_bf]
    for i, r in enumerate(result_bf):
        assert r.dtype == jnp.bfloat16 and r.shape == (B, 1)
        assert jnp.allclose(r.astype(jnp.float32), ref[i].astype(jnp.float32),
                            atol=1e-2, rtol=2e-2), "mismatch vs reference (bf16)"

    # Packed (lane-dense slab) path matches as well.
    packed = jax.block_until_ready(
        net_forward(x, weights, force_pallas=True, return_packed=True))
    assert packed.shape == (8, 4 * LANE)
    for i in range(4):
        got = packed[:, i * LANE:(i + 1) * LANE].reshape(-1)[:B].reshape(B, 1)
        assert jnp.allclose(got, ref[i], atol=1e-6, rtol=1e-6), "mismatch (packed)"

    # Tiny-batch fast path (plain jnp dispatch) also matches.
    result3 = net_forward(x, weights)
    for r, rr in zip(result3, ref):
        assert jnp.allclose(r, rr, atol=1e-6, rtol=1e-6), "mismatch vs reference (jnp path)"

    print("KERNEL_OK")
</pallas_src>

<mosaic_0001>
module attributes {stable_mosaic.version = 11 : i64} {
  func.func @chain_linear_kernel(%arg0: i32, %arg1: memref<4xf32, #tpu.memory_space<smem>>, %arg2: memref<8x128xf32, #tpu.memory_space<vmem>>, %arg3: memref<8x512xf32, #tpu.memory_space<vmem>>) attributes {dimension_semantics = [#tpu.dimension_semantics<parallel>], iteration_bounds = array<i64: 1>, scalar_prefetch = 1 : i64, scratch_operands = 0 : i64, tpu.core_type = #tpu.core_type<tc>, window_params = [{transform_indices = @transform_0, window_bounds = array<i64: 8, 128>}, {transform_indices = @transform_1, window_bounds = array<i64: 8, 512>}]} {
    %c0 = arith.constant 0 : index
    %c0_0 = arith.constant 0 : index
    %0 = vector.load %arg2[%c0, %c0_0] : memref<8x128xf32, #tpu.memory_space<vmem>>, vector<8x128xf32>
    %c0_1 = arith.constant 0 : index
    %1 = memref.load %arg1[%c0_1] : memref<4xf32, #tpu.memory_space<smem>>
    %2 = vector.broadcast %1 : f32 to vector<8x128xf32>
    %3 = arith.mulf %0, %2 : vector<8x128xf32>
    %c0_2 = arith.constant 0 : index
    %c0_3 = arith.constant 0 : index
    %4 = vector.load %arg3[%c0_2, %c0_3] : memref<8x512xf32, #tpu.memory_space<vmem>>, vector<8x128xf32>
    tpu.vector_store %arg3[%c0_2, %c0_3], %3 {strides = array<i32>} : memref<8x512xf32, #tpu.memory_space<vmem>>, vector<8x128xf32>,
    %c1 = arith.constant 1 : index
    %5 = memref.load %arg1[%c1] : memref<4xf32, #tpu.memory_space<smem>>
    %6 = vector.broadcast %5 : f32 to vector<8x128xf32>
    %7 = arith.mulf %0, %6 : vector<8x128xf32>
    %c0_4 = arith.constant 0 : index
    %c128 = arith.constant 128 : index
    %8 = vector.load %arg3[%c0_4, %c128] : memref<8x512xf32, #tpu.memory_space<vmem>>, vector<8x128xf32>
    tpu.vector_store %arg3[%c0_4, %c128], %7 {strides = array<i32>} : memref<8x512xf32, #tpu.memory_space<vmem>>, vector<8x128xf32>,
    %c2 = arith.constant 2 : index
    %9 = memref.load %arg1[%c2] : memref<4xf32, #tpu.memory_space<smem>>
    %10 = vector.broadcast %9 : f32 to vector<8x128xf32>
    %11 = arith.mulf %0, %10 : vector<8x128xf32>
    %c0_5 = arith.constant 0 : index
    %c256 = arith.constant 256 : index
    %12 = vector.load %arg3[%c0_5, %c256] : memref<8x512xf32, #tpu.memory_space<vmem>>, vector<8x128xf32>
    tpu.vector_store %arg3[%c0_5, %c256], %11 {strides = array<i32>} : memref<8x512xf32, #tpu.memory_space<vmem>>, vector<8x128xf32>,
    %c3 = arith.constant 3 : index
    %13 = memref.load %arg1[%c3] : memref<4xf32, #tpu.memory_space<smem>>
    %14 = vector.broadcast %13 : f32 to vector<8x128xf32>
    %15 = arith.mulf %0, %14 : vector<8x128xf32>
    %c0_6 = arith.constant 0 : index
    %c384 = arith.constant 384 : index
    %16 = vector.load %arg3[%c0_6, %c384] : memref<8x512xf32, #tpu.memory_space<vmem>>, vector<8x128xf32>
    tpu.vector_store %arg3[%c0_6, %c384], %15 {strides = array<i32>} : memref<8x512xf32, #tpu.memory_space<vmem>>, vector<8x128xf32>,
    return
  }
  func.func @transform_0(%arg0: i32, %arg1: memref<4xf32, #tpu.memory_space<smem>>) -> (i32, i32) {
    %c0_i32 = arith.constant 0 : i32
    %c0_i32_0 = arith.constant 0 : i32
    return %arg0, %c0_i32 : i32, i32
  }
  func.func @transform_1(%arg0: i32, %arg1: memref<4xf32, #tpu.memory_space<smem>>) -> (i32, i32) {
    %c0_i32 = arith.constant 0 : i32
    %c0_i32_0 = arith.constant 0 : i32
    return %arg0, %c0_i32 : i32, i32
  }
}

</mosaic_0001>

<llo_original>
// kernel: net_forward.1
$region0: #{net_forward.1}
  #allocation0 [shape = 'u32[]', space=smem, size = 0x4, offset = 0x4, fixed_abs, tag = 'smem constant byte address 0x4 - core index']
  #allocation1 [shape = 'u32[144,128]{1,0:T(1,128)}', space=vmem, size = 0x12000, scoped, tag = 'internal scratch']
  #allocation2 [shape = 's32[1]{0}', space=sflag, size = 0x4, scoped, tag = 'scoped memory for net_forward.1']
  #allocation3 [shape = 'u8[512]{0}', space=smem, size = 0x200, scoped, tag = 'prefetched SMEM operand 0']
  %s0 = inlined_call_operand.vmem [shape: f32[4], index: 0, kind: input, shape index: {}]
  %s1 = inlined_call_operand.vmem [shape: f32[8,128], index: 1, kind: input, shape index: {}]
  %s2 = inlined_call_operand.vmem [shape: f32[8,512], index: 2, kind: output, shape index: {}]
  %s3 = sld [smem:[#allocation0]]
  $region14: #{net_forward.1} parent=0
    _
  %s5 = ssub.s32 1, %s3
  %s6 = scalar_select 0, %s5, %s3
  %s7 = sshll.u32 %s0, 4
  %s8 = int_to_ptr.vmem [resolvable:$true] %s7
  %10 = dma.vmem_to_smem %s8, 16, [#allocation3], [#allocation2]
  %11 = dma.done [#allocation2], 16
  %12 = sfence
  // Predicated region
  $region2: #{net_forward.1} parent=0 // pred_check
    _
  $region3: #{net_forward.1} parent=0 // pred_check_branch
    %14 = sbr.rel (0) target = $region5
  $region4: #{net_forward.1} parent=0 // pred_region
    _
  $region5: #{net_forward.1} parent=0 // pred_fallthru
    _
  %v15 = vld [vmem:[%s1] sm:$0xff]
  %s16 = sld [smem:[#allocation3]]
  %v17 = vstv %s16
  %v18 = vmul.f32 %v15, %v17
  %19 = vst [vmem:[%s2] sm:$0xff] %v18
  %s20 = sld [smem:[#allocation3 + $0x1]]
  %v21 = vstv %s20
  %v22 = vmul.f32 %v15, %v21
  %23 = vst [vmem:[%s2 + $0x8] sm:$0xff] %v22
  %s24 = sld [smem:[#allocation3 + $0x2]]
  %v25 = vstv %s24
  %v26 = vmul.f32 %v15, %v25
  %27 = vst [vmem:[%s2 + $0x10] sm:$0xff] %v26
  %s28 = sld [smem:[#allocation3 + $0x3]]
  %v29 = vstv %s28
  %v30 = vmul.f32 %v15, %v29
  %31 = vst [vmem:[%s2 + $0x18] sm:$0xff] %v30
  // Predicated region
  $region6: #{net_forward.1} parent=0 // pred_check
    _
  $region7: #{net_forward.1} parent=0 // pred_check_branch
    %33 = sbr.rel (0) target = $region9
  $region8: #{net_forward.1} parent=0 // pred_region
    _
  $region9: #{net_forward.1} parent=0 // pred_fallthru
    _
  // Predicated region
  $region10: #{net_forward.1} parent=0 // pred_check
    _
  $region11: #{net_forward.1} parent=0 // pred_check_branch
    %35 = sbr.rel (0) target = $region13
  $region12: #{net_forward.1} parent=0 // pred_region
    _
  $region13: #{net_forward.1} parent=0 // pred_fallthru
    _

</llo_original>
